<compile_context>
chip_gen: v7x
topology: tpu7x:2x2x1
jax: 0.10.0
libtpu: 0.0.40
codegen_flags: <defaults>
</compile_context>

<pallas_src>
import functools

import jax
import jax.numpy as jnp
from jax.experimental import pallas as pl
from jax.experimental.pallas import tpu as pltpu


_LANE = 128
_NEG_BIG = -1e30  # "minus infinity" bias for padded class columns of head 1


def _mil_kernel(x_ref, w_ref, b_ref, out_ref, *, d_pad):
    x = x_ref[...].astype(jnp.float32)

    # One fused MXU matmul for both heads: (N, dim_in) @ (dim_in, 2*d_pad).
    s = jnp.dot(x, w_ref[...], preferred_element_type=jnp.float32) + b_ref[...]
    s0 = s[:, :d_pad]          # mil_score0 (static, lane-aligned split)
    s1 = s[:, d_pad:]          # mil_score1 (padded cols hold -1e30 bias)

    # softmax over rois (axis 0)
    e0 = jnp.exp(s0 - jnp.max(s0, axis=0, keepdims=True))
    p0 = e0 * (1.0 / jnp.sum(e0, axis=0, keepdims=True))

    # softmax over classes (axis 1); padded classes underflow to exactly 0
    e1 = jnp.exp(s1 - jnp.max(s1, axis=1, keepdims=True))
    p1 = e1 * (1.0 / jnp.sum(e1, axis=1, keepdims=True))

    out_ref[...] = (p0 * p1).astype(out_ref.dtype)


def _mil_kernel_masked(x_ref, w_ref, b_ref, m0_ref, m1_ref, out_ref, *, d_pad):
    x = x_ref[...].astype(jnp.float32)

    s = jnp.dot(x, w_ref[...], preferred_element_type=jnp.float32) + b_ref[...]
    # PyTorch semantics: masks multiply the pre-softmax scores.
    s0 = s[:, :d_pad] * m0_ref[...].astype(jnp.float32)
    s1 = s[:, d_pad:] * m1_ref[...].astype(jnp.float32)

    e0 = jnp.exp(s0 - jnp.max(s0, axis=0, keepdims=True))
    p0 = e0 * (1.0 / jnp.sum(e0, axis=0, keepdims=True))

    e1 = jnp.exp(s1 - jnp.max(s1, axis=1, keepdims=True))
    p1 = e1 * (1.0 / jnp.sum(e1, axis=1, keepdims=True))

    out_ref[...] = (p0 * p1).astype(out_ref.dtype)


def prepare_mil_params(w0, b0, w1, b1):
    """One-time (off the per-call hot path) fusion of the two Linear heads.

    Returns (w_fused, b_fused, dim_out, d_pad):
      w_fused: (dim_in, 2*d_pad) f32. Columns [0, dim_out) = W0^T,
               columns [d_pad, d_pad+dim_out) = W1^T, rest zero.
      b_fused: (1, 2*d_pad) f32. Padded class columns of head 1 are -1e30 so
               the axis-1 softmax ignores them.
    """
    dim_out, dim_in = w0.shape
    d_pad = ((dim_out + _LANE - 1) // _LANE) * _LANE

    w = jnp.zeros((dim_in, 2 * d_pad), jnp.float32)
    w = w.at[:, :dim_out].set(jnp.transpose(w0).astype(jnp.float32))
    w = w.at[:, d_pad:d_pad + dim_out].set(jnp.transpose(w1).astype(jnp.float32))

    b = jnp.zeros((1, 2 * d_pad), jnp.float32)
    b = b.at[0, :dim_out].set(b0.astype(jnp.float32))
    b = b.at[0, d_pad:].set(_NEG_BIG)
    b = b.at[0, d_pad:d_pad + dim_out].set(b1.astype(jnp.float32))

    return w, b, dim_out, d_pad


def mil_outputs_forward(x, params, mask0=None, mask1=None):
    """x: (N, dim_in) or (N, dim_in, 1, 1); params from prepare_mil_params."""
    w, b, dim_out, d_pad = params
    if x.ndim == 4:
        x = x[:, :, 0, 0]  # squeeze(3).squeeze(2)
    n, dim_in = x.shape

    vmem = pl.BlockSpec(memory_space=pltpu.MemorySpace.VMEM)
    out_shape = jax.ShapeDtypeStruct((n, d_pad), jnp.float32)

    has_mask = (mask0 is not None) or (mask1 is not None)
    cost = pl.CostEstimate(
        flops=2 * n * dim_in * 2 * d_pad + 8 * n * d_pad,
        transcendentals=2 * n * d_pad,
        bytes_accessed=4 * (x.size + w.size + b.size + n * d_pad
                            + (2 * n * d_pad if has_mask else 0)),
    )

    if not has_mask:
        out = pl.pallas_call(
            functools.partial(_mil_kernel, d_pad=d_pad),
            out_shape=out_shape,
            in_specs=[vmem] * 3,
            out_specs=vmem,
            cost_estimate=cost,
        )(x, w, b)
    else:
        m0 = jnp.ones((n, dim_out), jnp.float32) if mask0 is None \
            else mask0.astype(jnp.float32)
        m1 = jnp.ones((n, dim_out), jnp.float32) if mask1 is None \
            else mask1.astype(jnp.float32)
        # Pad masks with 1.0 so padded columns keep their (0 / -1e30) scores.
        m0 = jnp.pad(m0, ((0, 0), (0, d_pad - dim_out)), constant_values=1.0)
        m1 = jnp.pad(m1, ((0, 0), (0, d_pad - dim_out)), constant_values=1.0)
        out = pl.pallas_call(
            functools.partial(_mil_kernel_masked, d_pad=d_pad),
            out_shape=out_shape,
            in_specs=[vmem] * 5,
            out_specs=vmem,
            cost_estimate=cost,
        )(x, w, b, m0, m1)

    return out[:, :dim_out]


def _reference(x, w0, b0, w1, b1, mask0=None, mask1=None):
    if x.ndim == 4:
        x = x[:, :, 0, 0]
    s0 = x @ w0.T + b0
    s1 = x @ w1.T + b1
    if mask0 is not None:
        s0 = s0 * mask0
    if mask1 is not None:
        s1 = s1 * mask1
    return jax.nn.softmax(s0, axis=0) * jax.nn.softmax(s1, axis=1)


if __name__ == "__main__":
    # Small shapes: N (rois) = 8, dim_in = 32, dim_out (classes) = 16.
    N, DIM_IN, DIM_OUT = 8, 32, 16

    key = jax.random.PRNGKey(0)
    kx, kw0, kw1, km = jax.random.split(key, 4)

    # Module input arrives as (N, dim_in, 1, 1), mimicking a conv-head feature map.
    x = jax.random.normal(kx, (N, DIM_IN, 1, 1), dtype=jnp.float32)

    # Deterministic init: normal_(std=0.01) weights, zero biases
    # (the cfg.Init_Kaiming=False branch of _init_weights).
    w0 = 0.01 * jax.random.normal(kw0, (DIM_OUT, DIM_IN), dtype=jnp.float32)
    b0 = jnp.zeros((DIM_OUT,), dtype=jnp.float32)
    w1 = 0.01 * jax.random.normal(kw1, (DIM_OUT, DIM_IN), dtype=jnp.float32)
    b1 = jnp.zeros((DIM_OUT,), dtype=jnp.float32)

    # Weight fusion / transpose / padding happens ONCE, off the per-call path.
    params = prepare_mil_params(w0, b0, w1, b1)

    # Tolerances: the module emits near-uniform probabilities (~1/(N*C));
    # rtol=1e-2 absorbs MXU/interpreter matmul rounding while still being far
    # tighter than any structural error (wrong axis / weight mapping).
    ATOL, RTOL = 1e-5, 1e-2

    # --- no-mask path ---
    out = jax.block_until_ready(mil_outputs_forward(x, params))
    ref = _reference(x, w0, b0, w1, b1)
    assert out.shape == (N, DIM_OUT)
    assert jnp.allclose(out, ref, atol=ATOL, rtol=RTOL), "no-mask mismatch"

    # --- masked path (PyTorch semantics: masks scale pre-softmax scores) ---
    mask0 = (jax.random.uniform(km, (N, DIM_OUT)) > 0.3).astype(jnp.float32)
    mask1 = jnp.ones((N, DIM_OUT), dtype=jnp.float32)
    out_m = jax.block_until_ready(mil_outputs_forward(x, params, mask0, mask1))
    ref_m = _reference(x, w0, b0, w1, b1, mask0, mask1)
    assert out_m.shape == (N, DIM_OUT)
    assert jnp.allclose(out_m, ref_m, atol=ATOL, rtol=RTOL), "masked mismatch"

    print("KERNEL_OK")
</pallas_src>

<mosaic_0001>
module attributes {stable_mosaic.version = 11 : i64} {
  func.func @_mil_kernel(%arg0: memref<8x32xf32, #tpu.memory_space<vmem>>, %arg1: memref<32x256xf32, #tpu.memory_space<vmem>>, %arg2: memref<1x256xf32, #tpu.memory_space<vmem>>, %arg3: memref<8x128xf32, #tpu.memory_space<vmem>>) attributes {dimension_semantics = [], scalar_prefetch = 0 : i64, scratch_operands = 0 : i64, tpu.core_type = #tpu.core_type<tc>} {
    %c0 = arith.constant 0 : index
    %c0_0 = arith.constant 0 : index
    %0 = vector.load %arg0[%c0, %c0_0] : memref<8x32xf32, #tpu.memory_space<vmem>>, vector<8x32xf32>
    %c0_1 = arith.constant 0 : index
    %c0_2 = arith.constant 0 : index
    %1 = vector.load %arg1[%c0_1, %c0_2] : memref<32x256xf32, #tpu.memory_space<vmem>>, vector<32x256xf32>
    %cst = arith.constant dense<0.000000e+00> : vector<8x256xf32>
    %2 = tpu.matmul %0, %1, %cst {dimension_numbers = #tpu.dot_dimension_numbers<[1], [0], [0], [1], [0, 0, 1, 1], [], []>} : vector<8x32xf32>, vector<32x256xf32>, vector<8x256xf32> -> vector<8x256xf32>
    %c0_3 = arith.constant 0 : index
    %c0_4 = arith.constant 0 : index
    %3 = vector.load %arg2[%c0_3, %c0_4] : memref<1x256xf32, #tpu.memory_space<vmem>>, vector<1x256xf32>
    %4 = vector.broadcast %3 : vector<1x256xf32> to vector<8x256xf32>
    %5 = arith.addf %2, %4 : vector<8x256xf32>
    %6 = vector.extract_strided_slice %5 {offsets = [0, 0], sizes = [8, 128], strides = [1, 1]} : vector<8x256xf32> to vector<8x128xf32>
    %7 = vector.extract_strided_slice %5 {offsets = [0, 128], sizes = [8, 128], strides = [1, 1]} : vector<8x256xf32> to vector<8x128xf32>
    %cst_5 = arith.constant dense<0xFF800000> : vector<128xf32>
    %8 = vector.multi_reduction <maximumf>, %6, %cst_5 [0] : vector<8x128xf32> to vector<128xf32>
    %9 = vector.shape_cast %8 : vector<128xf32> to vector<1x128xf32>
    %10 = vector.broadcast %9 : vector<1x128xf32> to vector<8x128xf32>
    %11 = arith.subf %6, %10 : vector<8x128xf32>
    %12 = math.exp %11 : vector<8x128xf32>
    %cst_6 = arith.constant dense<0.000000e+00> : vector<128xf32>
    %13 = vector.multi_reduction <add>, %12, %cst_6 [0] : vector<8x128xf32> to vector<128xf32>
    %14 = vector.shape_cast %13 : vector<128xf32> to vector<1x128xf32>
    %cst_7 = arith.constant 1.000000e+00 : f32
    %15 = vector.broadcast %cst_7 : f32 to vector<1x128xf32>
    %16 = arith.divf %15, %14 : vector<1x128xf32>
    %17 = vector.broadcast %16 : vector<1x128xf32> to vector<8x128xf32>
    %18 = arith.mulf %12, %17 : vector<8x128xf32>
    %cst_8 = arith.constant dense<0xFF800000> : vector<8xf32>
    %19 = vector.multi_reduction <maximumf>, %7, %cst_8 [1] : vector<8x128xf32> to vector<8xf32>
    %20 = vector.shape_cast %19 : vector<8xf32> to vector<8x1xf32>
    %21 = vector.broadcast %20 : vector<8x1xf32> to vector<8x128xf32>
    %22 = arith.subf %7, %21 : vector<8x128xf32>
    %23 = math.exp %22 : vector<8x128xf32>
    %cst_9 = arith.constant dense<0.000000e+00> : vector<8xf32>
    %24 = vector.multi_reduction <add>, %23, %cst_9 [1] : vector<8x128xf32> to vector<8xf32>
    %25 = vector.shape_cast %24 : vector<8xf32> to vector<8x1xf32>
    %cst_10 = arith.constant 1.000000e+00 : f32
    %26 = vector.broadcast %cst_10 : f32 to vector<8x1xf32>
    %27 = arith.divf %26, %25 : vector<8x1xf32>
    %28 = vector.broadcast %27 : vector<8x1xf32> to vector<8x128xf32>
    %29 = arith.mulf %23, %28 : vector<8x128xf32>
    %30 = arith.mulf %18, %29 : vector<8x128xf32>
    %c0_11 = arith.constant 0 : index
    %c0_12 = arith.constant 0 : index
    %31 = vector.load %arg3[%c0_11, %c0_12] : memref<8x128xf32, #tpu.memory_space<vmem>>, vector<8x128xf32>
    tpu.vector_store %arg3[%c0_11, %c0_12], %30 {strides = array<i32>} : memref<8x128xf32, #tpu.memory_space<vmem>>, vector<8x128xf32>,
    return
  }
}

</mosaic_0001>

<llo_original>
// kernel: tpu_custom_call.1
$region0: #{tpu_custom_call.1}
  #allocation0 [shape = 'u32[]', space=smem, size = 0x4, offset = 0x4, fixed_abs, tag = 'smem constant byte address 0x4 - core index']
  #allocation1 [shape = 'u32[144,128]{1,0:T(1,128)}', space=vmem, size = 0x12000, scoped, tag = 'internal scratch']
  %s0 = inlined_call_operand.hbm [shape: f32[8,32], index: 0, kind: input, shape index: {}]
  %s1 = inlined_call_operand.hbm [shape: f32[32,256], index: 1, kind: input, shape index: {}]
  %s2 = inlined_call_operand.vmem [shape: f32[1,256], index: 2, kind: input, shape index: {}]
  %s3 = inlined_call_operand.hbm [shape: f32[8,128], index: 3, kind: output, shape index: {}]
  %s4 = sld [smem:[#allocation0]]
  $region30: #{tpu_custom_call.1} parent=0
    _
  %s6 = ssub.s32 1, %s4
  %s7 = scalar_select 0, %s6, %s4
  $region1: #{tpu_custom_call.1} parent=0
    #allocation2 [shape = 'u8[4096]{0}', space=vmem, size = 0x1000, scoped, tag = 'input window, operand 0, single buffered']
    #allocation3 [shape = 's32[1]{0}', space=sflag, size = 0x4, scoped, tag = 'scoped memory for tpu_custom_call.1']
    #allocation4 [shape = 's32[1]{0}', space=sflag, size = 0x4, scoped, tag = 'scoped memory for tpu_custom_call.1']
    #allocation5 [shape = 'u8[32768]{0}', space=vmem, size = 0x8000, scoped, tag = 'input window, operand 1, single buffered']
    #allocation6 [shape = 's32[1]{0}', space=sflag, size = 0x4, scoped, tag = 'scoped memory for tpu_custom_call.1']
    #allocation7 [shape = 'u8[4096]{0}', space=vmem, size = 0x1000, scoped, tag = 'output window, operand 0, single buffered']
    %8 = vsyncpa [#allocation3], 0
    %9 = vsyncpa [#allocation6], 0
    %10 = vsyncpa [#allocation4], 0
    // Predicated region
    $region2: #{tpu_custom_call.1} parent=1 // pred_check
      _
    $region3: #{tpu_custom_call.1} parent=1 // pred_check_branch
      %12 = sbr.rel (0) target = $region5
    $region4: #{tpu_custom_call.1} parent=1 // pred_region
      %s14 = ssub.s32 128, 128
      %15 = vsyncadd [#allocation3], %s14
      %s17 = sshll.u32 [#allocation2], 4
      %s18 = int_to_ptr.vmem [resolvable:$true] %s17
      %20 = dma.hbm_to_vmem [thread:$0]  %s0, 128, %s18, [#allocation3]
    $region5: #{tpu_custom_call.1} parent=1 // pred_fallthru
      _
    // Predicated region
    $region6: #{tpu_custom_call.1} parent=1 // pred_check
      _
    $region7: #{tpu_custom_call.1} parent=1 // pred_check_branch
      %22 = sbr.rel (0) target = $region9
    $region8: #{tpu_custom_call.1} parent=1 // pred_region
      %s24 = ssub.s32 1024, 1024
      %25 = vsyncadd [#allocation6], %s24
      %s26 = sshll.u32 [#allocation5], 4
      %s27 = int_to_ptr.vmem [resolvable:$true] %s26
      %32 = dma.hbm_to_vmem [thread:$0]  %s1, 1024, %s27, [#allocation6], 256, 256, 16
    $region9: #{tpu_custom_call.1} parent=1 // pred_fallthru
      _
    // Predicated region
    $region10: #{tpu_custom_call.1} parent=1 // pred_check
      _
    $region11: #{tpu_custom_call.1} parent=1 // pred_check_branch
      %34 = sbr.rel (0) target = $region13
    $region12: #{tpu_custom_call.1} parent=1 // pred_region
      _
    $region13: #{tpu_custom_call.1} parent=1 // pred_fallthru
      _
    // Predicated region
    $region14: #{tpu_custom_call.1} parent=1 // pred_check
      _
    $region15: #{tpu_custom_call.1} parent=1 // pred_check_branch
      %36 = sbr.rel (0) target = $region17
    $region16: #{tpu_custom_call.1} parent=1 // pred_region
      %37 = dma.done [#allocation3], 128
    $region17: #{tpu_custom_call.1} parent=1 // pred_fallthru
      _
    // Predicated region
    $region18: #{tpu_custom_call.1} parent=1 // pred_check
      _
    $region19: #{tpu_custom_call.1} parent=1 // pred_check_branch
      %39 = sbr.rel (0) target = $region21
    $region20: #{tpu_custom_call.1} parent=1 // pred_region
      %40 = dma.done [#allocation6], 1024
    $region21: #{tpu_custom_call.1} parent=1 // pred_fallthru
      _
    %v41 = vld [vmem:[#allocation2] sm:$0xff]
    %v42 = vld [vmem:[#allocation5] sm:$0xff]
    %v43 = vld [vmem:[#allocation5 + $0x8] sm:$0xff]
    %v44 = vld [vmem:[#allocation5 + $0x10] sm:$0xff]
    %v45 = vld [vmem:[#allocation5 + $0x18] sm:$0xff]
    %v46 = vld [vmem:[#allocation5 + $0x20] sm:$0xff]
    %v47 = vld [vmem:[#allocation5 + $0x28] sm:$0xff]
    %v48 = vld [vmem:[#allocation5 + $0x30] sm:$0xff]
    %v49 = vld [vmem:[#allocation5 + $0x38] sm:$0xff]
    %v50 = vld [vmem:[%s2] sm:$0x3]
    %v52 = vlaneseq
    %v53 = vshrl.u32 %v52, 7
    %v54 = vsub.s32 0, %v53
    %v55 = vrot.slane %v50, %v54
    %v56 = vlaneseq
    %v57 = vshrl.u32 %v56, 7
    %v58 = vsub.s32 1, %v57
    %v59 = vrot.slane %v50, %v58
    %vm62 = vcmask 261120
    %v64 = vsel %vm62, %v41, 0
    %66 = vmatprep.subr.mxu0 %v43
    %67 = vmatpush1.msra.mxu0 %v42
    %68 = vmatprep.subr.mxu0 %v45
    %69 = vmatpush1.msra.mxu0 %v44
    %70 = vmatprep.subr.mxu0 %v47
    %71 = vmatpush1.msra.mxu0 %v46
    %72 = vmatprep.subr.mxu0 %v49
    %73 = vmatpush1.msra.mxu0 %v48
    %74 = vmatprep.subr.mxu0 0.0
    %75 = vmatpush1.msra.mxu0 0.0
    %76 = vmatprep.subr.mxu0 0.0
    %77 = vmatpush1.msra.mxu0 0.0
    %78 = vmatprep.subr.mxu0 0.0
    %79 = vmatpush1.msra.mxu0 0.0
    %80 = vmatprep.subr.mxu0 0.0
    %81 = vmatpush1.msra.mxu0 0.0
    %82 = vmatprep.subr.mxu0 0.0
    %83 = vmatpush1.msra.mxu0 0.0
    %84 = vmatprep.subr.mxu0 0.0
    %85 = vmatpush1.msra.mxu0 0.0
    %86 = vmatprep.subr.mxu0 0.0
    %87 = vmatpush1.msra.mxu0 0.0
    %88 = vmatprep.subr.mxu0 0.0
    %89 = vmatpush1.msra.mxu0 0.0
    %90 = vmatprep.subr.mxu0 0.0
    %91 = vmatpush1.msra.mxu0 0.0
    %92 = vmatprep.subr.mxu0 0.0
    %93 = vmatpush1.msra.mxu0 0.0
    %94 = vmatprep.subr.mxu0 0.0
    %95 = vmatpush1.msra.mxu0 0.0
    %96 = vmatprep.subr.mxu0 0.0
    %97 = vmatpush1.msra.mxu0 0.0
    %98 = vmatprep.subr.mxu0 0.0
    %99 = vmatpush1.msra.mxu0 0.0
    %100 = vmatprep.subr.mxu0 0.0
    %101 = vmatpush1.msra.mxu0 0.0
    %102 = vmatprep.subr.mxu0 0.0
    %103 = vmatpush1.msra.mxu0 0.0
    %104 = vmatprep.subr.mxu0 0.0
    %105 = vmatpush1.msra.mxu0 0.0
    %106 = vmatprep.subr.mxu0 0.0
    %107 = vmatpush1.msra.mxu0 0.0
    %108 = vmatprep.subr.mxu0 0.0
    %109 = vmatpush1.msra.mxu0 0.0
    %110 = vmatprep.subr.mxu0 0.0
    %111 = vmatpush1.msra.mxu0 0.0
    %112 = vmatprep.subr.mxu0 0.0
    %113 = vmatpush1.msra.mxu0 0.0
    %114 = vmatprep.subr.mxu0 0.0
    %115 = vmatpush1.msra.mxu0 0.0
    %116 = vmatprep.subr.mxu0 0.0
    %117 = vmatpush1.msra.mxu0 0.0
    %118 = vmatprep.subr.mxu0 0.0
    %119 = vmatpush1.msra.mxu0 0.0
    %120 = vmatprep.subr.mxu0 0.0
    %121 = vmatpush1.msra.mxu0 0.0
    %122 = vmatprep.subr.mxu0 0.0
    %123 = vmatpush1.msra.mxu0 0.0
    %124 = vmatprep.subr.mxu0 0.0
    %125 = vmatpush1.msra.mxu0 0.0
    %126 = vmatprep.subr.mxu0 0.0
    %127 = vmatpush1.msra.mxu0 0.0
    %128 = vmatprep.subr.mxu0 0.0
    %129 = vmatpush1.msra.mxu0 0.0
    %130 = vmatprep.mubr.f32.mxu0 0.0
    %131 = vmatmul.mubr.f32.gmra.mrb[0].mxu0 %v64
    %v132 = vpop.f32.mrb[0].mxu0
    %v133 = vadd.f32 %v55, %v132
    %v134 = vpop.f32.mrb[0].mxu0
    %v135 = vadd.f32 %v59, %v134
    %136 = vdwg.mxu0
    %v137 = vrot.slane %v133, 4
    %v138 = vmax.f32 %v133, %v137
    %v139 = vrot.slane %v138, 2
    %v140 = vmax.f32 %v138, %v139
    %v141 = vrot.slane %v140, 1
    %v142 = vmax.f32 %v140, %v141
    %v143 = vsub.f32 %v133, %v142
    %v144 = vmul.f32 %v143, 1.442695
    %v145 = vpow.pop %v144
    %v146 = vrot.slane %v145, 4
    %v147 = vadd.f32 %v145, %v146
    %v148 = vrot.slane %v147, 2
    %v149 = vadd.f32 %v147, %v148
    %v150 = vrot.slane %v149, 1
    %v151 = vadd.f32 %v149, %v150
    %v152 = vrcp.pop %v151
    %v153 = vmul.f32 1.0, %v152
    %v154 = vmul.f32 %v145, %v153
    %155 = vmax.xlane.f32.xlu0 %v135
    %v156 = vpop.xlane.xlu0 %155
    %v157 = vsub.f32 %v135, %v156
    %v158 = vmul.f32 %v157, 1.442695
    %v159 = vpow.pop %v158
    %160 = vadd.xlane.f32.xlu0 %v159
    %v161 = vpop.xlane.xlu0 %160
    %v162 = vrcp.pop %v161
    %v163 = vmul.f32 1.0, %v162
    %v164 = vmul.f32 %v159, %v163
    %v165 = vmul.f32 %v154, %v164
    %166 = vst [vmem:[#allocation7] sm:$0xff] %v165
    // Predicated region
    $region22: #{tpu_custom_call.1} parent=1 // pred_check
      _
    $region23: #{tpu_custom_call.1} parent=1 // pred_check_branch
      %168 = sbr.rel (0) target = $region25
    $region24: #{tpu_custom_call.1} parent=1 // pred_region
      %s170 = ssub.s32 128, 128
      %171 = vsyncadd [#allocation4], %s170
      %s173 = sshll.u32 [#allocation7], 4
      %s174 = int_to_ptr.vmem [resolvable:$true] %s173
      %176 = dma.vmem_to_hbm [thread:$0]  %s174, 128, %s3, [#allocation4]
    $region25: #{tpu_custom_call.1} parent=1 // pred_fallthru
      _
    // Predicated region
    $region26: #{tpu_custom_call.1} parent=1 // pred_check
      _
    $region27: #{tpu_custom_call.1} parent=1 // pred_check_branch
      %178 = sbr.rel (0) target = $region29
    $region28: #{tpu_custom_call.1} parent=1 // pred_region
      %179 = dma.done [#allocation4], 128
    $region29: #{tpu_custom_call.1} parent=1 // pred_fallthru
      _
    %180 = vsyncpa [#allocation3], 1
    %181 = vsyncpa [#allocation6], 1
    %182 = vsyncpa [#allocation4], 1

</llo_original>
